<compile_context>
chip_gen: v7x
topology: tpu7x:2x2x1
jax: 0.10.0
libtpu: 0.0.40
codegen_flags: <defaults>
</compile_context>

<pallas_src>
import functools

import jax
import jax.numpy as jnp
from jax.experimental import pallas as pl
from jax.experimental.pallas import tpu as pltpu

# --- model constants (from the PyTorch module) ---
NUM_ITEMS = 3883
NUM_YEARS = 81
NUM_AGES = 7
NUM_OCCUPS = 21
NUM_USERS = 6040
NUM_ZIPS = 3439
EMB_SIZE = 128

USER_REP_DIM = EMB_SIZE * 5   # 640
ITEM_REP_DIM = EMB_SIZE * 2   # 256

DEFAULT_TB = 2048             # batch-tile rows


def _round_up(x, m):
    return (x + m - 1) // m * m


# ----------------------------------------------------------------------------
# Pallas kernel: one batch tile of the fused ReLU -> Linear -> row-dot.
# ----------------------------------------------------------------------------
def nominator_kernel(u_ref, w_ref, b_ref, i_ref, o_ref):
    """u_ref: (TB, 640) bf16  user rep (pre-ReLU)
       w_ref: (640, 256) bf16 linear weight (transposed, grid-resident)
       b_ref: (1, 256)  f32   linear bias   (grid-resident)
       i_ref: (TB, 256) bf16  item rep
       o_ref: (1, TB)   f32   logits, lane-dense"""
    u = jnp.maximum(u_ref[...], 0)                                       # ReLU (VPU)
    h = jnp.dot(u, w_ref[...], preferred_element_type=jnp.float32)       # MXU bf16 -> f32 acc
    h = h + b_ref[...]                                                   # bias (f32)
    prod = h * i_ref[...].astype(jnp.float32)                            # f32
    o_ref[...] = jnp.sum(prod, axis=1)[None, :]                          # lane-dense store


def _nominator_logits(u, it, w_t, bias2d, *, tb):
    """u: (Bp, 640) bf16, it: (Bp, 256) bf16, w_t: (640, 256) bf16, bias2d: (1, 256) f32."""
    Bp = u.shape[0]
    n_tiles = Bp // tb

    cost = pl.CostEstimate(
        flops=2 * Bp * USER_REP_DIM * ITEM_REP_DIM + 4 * Bp * ITEM_REP_DIM,
        transcendentals=0,
        bytes_accessed=(Bp * USER_REP_DIM * 2 + Bp * ITEM_REP_DIM * 2
                        + USER_REP_DIM * ITEM_REP_DIM * 2
                        + ITEM_REP_DIM * 4 + Bp * 4),
    )

    return pl.pallas_call(
        nominator_kernel,
        out_shape=jax.ShapeDtypeStruct((1, Bp), jnp.float32),
        grid_spec=pltpu.PrefetchScalarGridSpec(
            num_scalar_prefetch=0,
            grid=(n_tiles,),
            in_specs=[
                pl.BlockSpec((tb, USER_REP_DIM), lambda i: (i, 0)),            # u tile
                pl.BlockSpec((USER_REP_DIM, ITEM_REP_DIM), lambda i: (0, 0)),  # W resident
                pl.BlockSpec((1, ITEM_REP_DIM), lambda i: (0, 0)),             # bias resident
                pl.BlockSpec((tb, ITEM_REP_DIM), lambda i: (i, 0)),            # item tile
            ],
            out_specs=pl.BlockSpec((1, tb), lambda i: (0, i)),                 # lane-dense out
        ),
        compiler_params=pltpu.CompilerParams(
            dimension_semantics=("parallel",)),   # megacore on v7x, no-op v5e/v6e
        cost_estimate=cost,
    )(u, w_t, bias2d, it)


# ----------------------------------------------------------------------------
# Parameter packing (one-time): combined bf16 tables + per-column row offsets.
# ----------------------------------------------------------------------------
def make_params(user_emb, gender_emb, age_emb, occup_emb, zip_emb,
                item_emb, year_emb, w, b):
    """w: (256, 640) torch-layout Linear weight, b: (256,)."""
    user_tables = (user_emb, gender_emb, age_emb, occup_emb, zip_emb)
    item_tables = (item_emb, year_emb)

    def pack(tables):
        sizes = [t.shape[0] for t in tables]
        offs = [0]
        for s in sizes[:-1]:
            offs.append(offs[-1] + s)
        combined = jnp.concatenate(tables, axis=0).astype(jnp.bfloat16)
        return combined, jnp.asarray(offs, jnp.int32)

    user_tbl, user_off = pack(user_tables)   # (9510, 128) bf16
    item_tbl, item_off = pack(item_tables)   # (3965, 128) bf16

    return dict(
        user_tbl=user_tbl, user_off=user_off,
        item_tbl=item_tbl, item_off=item_off,
        w_t=w.T.astype(jnp.bfloat16),                          # (640, 256)
        bias=b.reshape(1, ITEM_REP_DIM).astype(jnp.float32),   # (1, 256)
    )


# First column of each tower's categorical features is a 1-based id (torch does id-1).
_USER_IDX_ADJ = jnp.array([-1, 0, 0, 0, 0], jnp.int32)
_ITEM_IDX_ADJ = jnp.array([-1, 0], jnp.int32)


def nominator_forward(params, user_cat, item_cat, *, tb=DEFAULT_TB):
    """Full Nominator.forward (binary=True): user_cat (B,5) int32, item_cat (B,2) int32."""
    B = user_cat.shape[0]
    tb = min(tb, _round_up(B, 128))          # tile rows: multiple of 128, never > padded B
    Bp = _round_up(B, tb)

    # Combined-table row indices; pad the tiny index arrays (not the reps).
    uidx = user_cat + _USER_IDX_ADJ + params["user_off"]           # (B, 5)
    iidx = item_cat + _ITEM_IDX_ADJ + params["item_off"]           # (B, 2)
    uidx = jnp.pad(uidx, ((0, Bp - B), (0, 0)))                    # padded rows -> row 0
    iidx = jnp.pad(iidx, ((0, Bp - B), (0, 0)))

    # Single fused gather per tower, directly in bf16, directly tile-aligned.
    u = params["user_tbl"][uidx].reshape(Bp, USER_REP_DIM)         # (Bp, 640) bf16
    it = params["item_tbl"][iidx].reshape(Bp, ITEM_REP_DIM)        # (Bp, 256) bf16

    out = _nominator_logits(u, it, params["w_t"], params["bias"], tb=tb)
    return out[0, :B]   # matches torch .squeeze() -> (B,)


# ----------------------------------------------------------------------------
# Pure-JAX reference with the same bf16 operand precision (f32 accumulate).
# ----------------------------------------------------------------------------
def _reference(params, user_cat, item_cat):
    uidx = user_cat + _USER_IDX_ADJ + params["user_off"]
    iidx = item_cat + _ITEM_IDX_ADJ + params["item_off"]
    u = params["user_tbl"][uidx].reshape(user_cat.shape[0], USER_REP_DIM).astype(jnp.float32)
    it = params["item_tbl"][iidx].reshape(item_cat.shape[0], ITEM_REP_DIM).astype(jnp.float32)
    h = jnp.maximum(u, 0.0) @ params["w_t"].astype(jnp.float32) + params["bias"]
    return jnp.sum(h * it, axis=1)


if __name__ == "__main__":
    key = jax.random.PRNGKey(0)
    ks = jax.random.split(key, 16)

    # --- deterministic "pretrained" embedding tables ---
    item_emb   = jax.random.normal(ks[0], (NUM_ITEMS + 1, EMB_SIZE), jnp.float32) * 0.1
    year_emb   = jax.random.normal(ks[1], (NUM_YEARS, EMB_SIZE), jnp.float32) * 0.1
    user_emb   = jax.random.normal(ks[2], (NUM_USERS + 1, EMB_SIZE), jnp.float32) * 0.1
    gender_emb = jax.random.normal(ks[3], (2, EMB_SIZE), jnp.float32) * 0.1
    age_emb    = jax.random.normal(ks[4], (NUM_AGES, EMB_SIZE), jnp.float32) * 0.1
    occup_emb  = jax.random.normal(ks[5], (NUM_OCCUPS, EMB_SIZE), jnp.float32) * 0.1
    zip_emb    = jax.random.normal(ks[6], (NUM_ZIPS, EMB_SIZE), jnp.float32) * 0.1

    # --- Linear(640 -> 256) params, PyTorch-default-style uniform init ---
    bound = 1.0 / (USER_REP_DIM ** 0.5)
    w = jax.random.uniform(ks[7], (ITEM_REP_DIM, USER_REP_DIM), jnp.float32, -bound, bound)
    b = jax.random.uniform(ks[8], (ITEM_REP_DIM,), jnp.float32, -bound, bound)

    params = make_params(user_emb, gender_emb, age_emb, occup_emb, zip_emb,
                         item_emb, year_emb, w, b)

    fwd = jax.jit(nominator_forward, static_argnames=("tb",))

    def make_batch(kq, B):
        k0, k1, k2, k3, k4, k5, k6 = jax.random.split(kq, 7)
        user_cat = jnp.stack([
            jax.random.randint(k0, (B,), 1, NUM_USERS + 1),   # user id (1-based)
            jax.random.randint(k1, (B,), 0, 2),               # gender
            jax.random.randint(k2, (B,), 0, NUM_AGES),        # age
            jax.random.randint(k3, (B,), 0, NUM_OCCUPS),      # occupation
            jax.random.randint(k4, (B,), 0, NUM_ZIPS),        # zip
        ], axis=1).astype(jnp.int32)
        item_cat = jnp.stack([
            jax.random.randint(k5, (B,), 1, NUM_ITEMS + 1),   # item id (1-based)
            jax.random.randint(k6, (B,), 0, NUM_YEARS),       # year
        ], axis=1).astype(jnp.int32)
        return user_cat, item_cat

    # --- small example batch (single tile, padded 8 -> 128) ---
    B = 8
    user_cat, item_cat = make_batch(ks[9], B)
    logits = jax.block_until_ready(fwd(params, user_cat, item_cat))
    ref = _reference(params, user_cat, item_cat)
    assert logits.shape == (B,)
    assert jnp.allclose(logits, ref, rtol=2e-2, atol=2e-2)

    # --- second batch: exercises multi-tile grid + batch padding (200 -> 256, 2 tiles) ---
    B2 = 200
    user_cat2, item_cat2 = make_batch(ks[10], B2)
    logits2 = jax.block_until_ready(fwd(params, user_cat2, item_cat2, tb=128))
    ref2 = _reference(params, user_cat2, item_cat2)
    assert logits2.shape == (B2,)
    assert jnp.allclose(logits2, ref2, rtol=2e-2, atol=2e-2)

    # --- third batch: default large-tile path (tb clamps to 512, single tile) ---
    B3 = 500
    user_cat3, item_cat3 = make_batch(ks[11], B3)
    logits3 = jax.block_until_ready(fwd(params, user_cat3, item_cat3))
    ref3 = _reference(params, user_cat3, item_cat3)
    assert logits3.shape == (B3,)
    assert jnp.allclose(logits3, ref3, rtol=2e-2, atol=2e-2)

    print("KERNEL_OK")
</pallas_src>

<mosaic_0001>
module attributes {stable_mosaic.version = 11 : i64} {
  func.func @nominator_kernel(%arg0: i32, %arg1: memref<128x640xbf16, #tpu.memory_space<vmem>>, %arg2: memref<640x256xbf16, #tpu.memory_space<vmem>>, %arg3: memref<1x256xf32, #tpu.memory_space<vmem>>, %arg4: memref<128x256xbf16, #tpu.memory_space<vmem>>, %arg5: memref<1x128xf32, #tpu.memory_space<vmem>>) attributes {dimension_semantics = [#tpu.dimension_semantics<parallel>], iteration_bounds = array<i64: 1>, scalar_prefetch = 0 : i64, scratch_operands = 0 : i64, tpu.core_type = #tpu.core_type<tc>, window_params = [{transform_indices = @transform_0, window_bounds = array<i64: 128, 640>}, {pipeline_mode = #tpu.pipeline_mode<synchronous>, transform_indices = @transform_1, window_bounds = array<i64: 640, 256>}, {pipeline_mode = #tpu.pipeline_mode<synchronous>, transform_indices = @transform_2, window_bounds = array<i64: 1, 256>}, {transform_indices = @transform_3, window_bounds = array<i64: 128, 256>}, {transform_indices = @transform_4, window_bounds = array<i64: 1, 128>}]} {
    %c0 = arith.constant 0 : index
    %c0_0 = arith.constant 0 : index
    %0 = vector.load %arg1[%c0, %c0_0] : memref<128x640xbf16, #tpu.memory_space<vmem>>, vector<128x640xbf16>
    %cst = arith.constant 0.000000e+00 : bf16
    %1 = vector.broadcast %cst : bf16 to vector<128x640xbf16>
    %2 = arith.maximumf %0, %1 : vector<128x640xbf16>
    %c0_1 = arith.constant 0 : index
    %c0_2 = arith.constant 0 : index
    %3 = vector.load %arg2[%c0_1, %c0_2] : memref<640x256xbf16, #tpu.memory_space<vmem>>, vector<640x256xbf16>
    %cst_3 = arith.constant dense<0.000000e+00> : vector<128x256xf32>
    %4 = tpu.matmul %2, %3, %cst_3 {dimension_numbers = #tpu.dot_dimension_numbers<[1], [0], [0], [1], [0, 0, 1, 1], [], []>} : vector<128x640xbf16>, vector<640x256xbf16>, vector<128x256xf32> -> vector<128x256xf32>
    %c0_4 = arith.constant 0 : index
    %c0_5 = arith.constant 0 : index
    %5 = vector.load %arg3[%c0_4, %c0_5] : memref<1x256xf32, #tpu.memory_space<vmem>>, vector<1x256xf32>
    %6 = vector.broadcast %5 : vector<1x256xf32> to vector<128x256xf32>
    %7 = arith.addf %4, %6 : vector<128x256xf32>
    %c0_6 = arith.constant 0 : index
    %c0_7 = arith.constant 0 : index
    %8 = vector.load %arg4[%c0_6, %c0_7] : memref<128x256xbf16, #tpu.memory_space<vmem>>, vector<128x256xbf16>
    %9 = arith.extf %8 : vector<128x256xbf16> to vector<128x256xf32>
    %10 = arith.mulf %7, %9 : vector<128x256xf32>
    %cst_8 = arith.constant dense<0.000000e+00> : vector<128xf32>
    %11 = vector.multi_reduction <add>, %10, %cst_8 [1] : vector<128x256xf32> to vector<128xf32>
    %12 = vector.shape_cast %11 : vector<128xf32> to vector<1x128xf32>
    %c0_9 = arith.constant 0 : index
    %c0_10 = arith.constant 0 : index
    %13 = vector.load %arg5[%c0_9, %c0_10] : memref<1x128xf32, #tpu.memory_space<vmem>>, vector<1x128xf32>
    tpu.vector_store %arg5[%c0_9, %c0_10], %12 {strides = array<i32>} : memref<1x128xf32, #tpu.memory_space<vmem>>, vector<1x128xf32>,
    return
  }
  func.func @transform_0(%arg0: i32) -> (i32, i32) {
    %c0_i32 = arith.constant 0 : i32
    %c0_i32_0 = arith.constant 0 : i32
    return %arg0, %c0_i32 : i32, i32
  }
  func.func @transform_1(%arg0: i32) -> (i32, i32) {
    %c0_i32 = arith.constant 0 : i32
    %c0_i32_0 = arith.constant 0 : i32
    %c0_i32_1 = arith.constant 0 : i32
    return %c0_i32, %c0_i32_0 : i32, i32
  }
  func.func @transform_2(%arg0: i32) -> (i32, i32) {
    %c0_i32 = arith.constant 0 : i32
    %c0_i32_0 = arith.constant 0 : i32
    %c0_i32_1 = arith.constant 0 : i32
    return %c0_i32, %c0_i32_0 : i32, i32
  }
  func.func @transform_3(%arg0: i32) -> (i32, i32) {
    %c0_i32 = arith.constant 0 : i32
    %c0_i32_0 = arith.constant 0 : i32
    return %arg0, %c0_i32 : i32, i32
  }
  func.func @transform_4(%arg0: i32) -> (i32, i32) {
    %c0_i32 = arith.constant 0 : i32
    %c0_i32_0 = arith.constant 0 : i32
    return %c0_i32, %arg0 : i32, i32
  }
}

</mosaic_0001>

<llo_original>
// kernel: nominator_forward.1
$region0: #{nominator_forward.1}
  #allocation0 [shape = 'u32[]', space=smem, size = 0x4, offset = 0x4, fixed_abs, tag = 'smem constant byte address 0x4 - core index']
  #allocation1 [shape = 'u32[144,128]{1,0:T(1,128)}', space=vmem, size = 0x12000, scoped, tag = 'internal scratch']
  %s0 = inlined_call_operand.vmem [shape: bf16[128,640], index: 0, kind: input, shape index: {}]
  %s1 = inlined_call_operand.vmem [shape: bf16[640,256], index: 1, kind: input, shape index: {}]
  %s2 = inlined_call_operand.vmem [shape: f32[1,256], index: 2, kind: input, shape index: {}]
  %s3 = inlined_call_operand.vmem [shape: bf16[128,256], index: 3, kind: input, shape index: {}]
  %s4 = inlined_call_operand.vmem [shape: f32[1,128], index: 4, kind: output, shape index: {}]
  %s5 = sld [smem:[#allocation0]]
  $region26: #{nominator_forward.1} parent=0
    _
  %s7 = ssub.s32 1, %s5
  %s8 = scalar_select 0, %s7, %s5
  // Predicated region
  $region2: #{nominator_forward.1} parent=0 // pred_check
    _
  $region3: #{nominator_forward.1} parent=0 // pred_check_branch
    %10 = sbr.rel (0) target = $region5
  $region4: #{nominator_forward.1} parent=0 // pred_region
    _
  $region5: #{nominator_forward.1} parent=0 // pred_fallthru
    _
  // Predicated region
  $region6: #{nominator_forward.1} parent=0 // pred_check
    _
  $region7: #{nominator_forward.1} parent=0 // pred_check_branch
    %12 = sbr.rel (0) target = $region9
  $region8: #{nominator_forward.1} parent=0 // pred_region
    _
  $region9: #{nominator_forward.1} parent=0 // pred_fallthru
    _
  // Predicated region
  $region10: #{nominator_forward.1} parent=0 // pred_check
    _
  $region11: #{nominator_forward.1} parent=0 // pred_check_branch
    %14 = sbr.rel (0) target = $region13
  $region12: #{nominator_forward.1} parent=0 // pred_region
    _
  $region13: #{nominator_forward.1} parent=0 // pred_fallthru
    _
  // Predicated region
  $region14: #{nominator_forward.1} parent=0 // pred_check
    _
  $region15: #{nominator_forward.1} parent=0 // pred_check_branch
    %16 = sbr.rel (0) target = $region17
  $region16: #{nominator_forward.1} parent=0 // pred_region
    _
  $region17: #{nominator_forward.1} parent=0 // pred_fallthru
    _
  %v18 = vld [vmem:[%s0] sm:$0xff]
  %v19 = vld [vmem:[%s0 + $0x8] sm:$0xff]
  %v20 = vld [vmem:[%s0 + $0x10] sm:$0xf]
  %v21 = vld [vmem:[%s0 + $0x14] sm:$0xff]
  %v22 = vld [vmem:[%s0 + $0x1c] sm:$0xff]
  %v23 = vld [vmem:[%s0 + $0x24] sm:$0xf]
  %v24 = vld [vmem:[%s0 + $0x28] sm:$0xff]
  %v25 = vld [vmem:[%s0 + $0x30] sm:$0xff]
  %v26 = vld [vmem:[%s0 + $0x38] sm:$0xf]
  %v27 = vld [vmem:[%s0 + $0x3c] sm:$0xff]
  %v28 = vld [vmem:[%s0 + $0x44] sm:$0xff]
  %v29 = vld [vmem:[%s0 + $0x4c] sm:$0xf]
  %v30 = vld [vmem:[%s0 + $0x50] sm:$0xff]
  %v31 = vld [vmem:[%s0 + $0x58] sm:$0xff]
  %v32 = vld [vmem:[%s0 + $0x60] sm:$0xf]
  %v33 = vld [vmem:[%s0 + $0x64] sm:$0xff]
  %v34 = vld [vmem:[%s0 + $0x6c] sm:$0xff]
  %v35 = vld [vmem:[%s0 + $0x74] sm:$0xf]
  %v36 = vld [vmem:[%s0 + $0x78] sm:$0xff]
  %v37 = vld [vmem:[%s0 + $0x80] sm:$0xff]
  %v38 = vld [vmem:[%s0 + $0x88] sm:$0xf]
  %v39 = vld [vmem:[%s0 + $0x8c] sm:$0xff]
  %v40 = vld [vmem:[%s0 + $0x94] sm:$0xff]
  %v41 = vld [vmem:[%s0 + $0x9c] sm:$0xf]
  %v42 = vld [vmem:[%s0 + $0xa0] sm:$0xff]
  %v43 = vld [vmem:[%s0 + $0xa8] sm:$0xff]
  %v44 = vld [vmem:[%s0 + $0xb0] sm:$0xf]
  %v45 = vld [vmem:[%s0 + $0xb4] sm:$0xff]
  %v46 = vld [vmem:[%s0 + $0xbc] sm:$0xff]
  %v47 = vld [vmem:[%s0 + $0xc4] sm:$0xf]
  %v48 = vld [vmem:[%s0 + $0xc8] sm:$0xff]
  %v49 = vld [vmem:[%s0 + $0xd0] sm:$0xff]
  %v50 = vld [vmem:[%s0 + $0xd8] sm:$0xf]
  %v51 = vld [vmem:[%s0 + $0xdc] sm:$0xff]
  %v52 = vld [vmem:[%s0 + $0xe4] sm:$0xff]
  %v53 = vld [vmem:[%s0 + $0xec] sm:$0xf]
  %v54 = vld [vmem:[%s0 + $0xf0] sm:$0xff]
  %v55 = vld [vmem:[%s0 + $0xf8] sm:$0xff]
  %v56 = vld [vmem:[%s0 + $0x100] sm:$0xf]
  %v57 = vld [vmem:[%s0 + $0x104] sm:$0xff]
  %v58 = vld [vmem:[%s0 + $0x10c] sm:$0xff]
  %v59 = vld [vmem:[%s0 + $0x114] sm:$0xf]
  %v60 = vld [vmem:[%s0 + $0x118] sm:$0xff]
  %v61 = vld [vmem:[%s0 + $0x120] sm:$0xff]
  %v62 = vld [vmem:[%s0 + $0x128] sm:$0xf]
  %v63 = vld [vmem:[%s0 + $0x12c] sm:$0xff]
  %v64 = vld [vmem:[%s0 + $0x134] sm:$0xff]
  %v65 = vld [vmem:[%s0 + $0x13c] sm:$0xf]
  %v66 = vmax.bf16 %v18, 0
  %v67 = vmax.bf16 %v19, 0
  %v68 = vmax.bf16 %v20, 0
  %v69 = vmax.bf16 %v21, 0
  %v70 = vmax.bf16 %v22, 0
  %v71 = vmax.bf16 %v23, 0
  %v72 = vmax.bf16 %v24, 0
  %v73 = vmax.bf16 %v25, 0
  %v74 = vmax.bf16 %v26, 0
  %v75 = vmax.bf16 %v27, 0
  %v76 = vmax.bf16 %v28, 0
  %v77 = vmax.bf16 %v29, 0
  %v78 = vmax.bf16 %v30, 0
  %v79 = vmax.bf16 %v31, 0
  %v80 = vmax.bf16 %v32, 0
  %v81 = vmax.bf16 %v33, 0
  %v82 = vmax.bf16 %v34, 0
  %v83 = vmax.bf16 %v35, 0
  %v84 = vmax.bf16 %v36, 0
  %v85 = vmax.bf16 %v37, 0
  %v86 = vmax.bf16 %v38, 0
  %v87 = vmax.bf16 %v39, 0
  %v88 = vmax.bf16 %v40, 0
  %v89 = vmax.bf16 %v41, 0
  %v90 = vmax.bf16 %v42, 0
  %v91 = vmax.bf16 %v43, 0
  %v92 = vmax.bf16 %v44, 0
  %v93 = vmax.bf16 %v45, 0
  %v94 = vmax.bf16 %v46, 0
  %v95 = vmax.bf16 %v47, 0
  %v96 = vmax.bf16 %v48, 0
  %v97 = vmax.bf16 %v49, 0
  %v98 = vmax.bf16 %v50, 0
  %v99 = vmax.bf16 %v51, 0
  %v100 = vmax.bf16 %v52, 0
  %v101 = vmax.bf16 %v53, 0
  %v102 = vmax.bf16 %v54, 0
  %v103 = vmax.bf16 %v55, 0
  %v104 = vmax.bf16 %v56, 0
  %v105 = vmax.bf16 %v57, 0
  %v106 = vmax.bf16 %v58, 0
  %v107 = vmax.bf16 %v59, 0
  %v108 = vmax.bf16 %v60, 0
  %v109 = vmax.bf16 %v61, 0
  %v110 = vmax.bf16 %v62, 0
  %v111 = vmax.bf16 %v63, 0
  %v112 = vmax.bf16 %v64, 0
  %v113 = vmax.bf16 %v65, 0
  %v114 = vld [vmem:[%s1] sm:$0xff]
  %v115 = vld [vmem:[%s1 + $0x8] sm:$0xff]
  %v116 = vld [vmem:[%s1 + $0x10] sm:$0xff]
  %v117 = vld [vmem:[%s1 + $0x18] sm:$0xff]
  %v118 = vld [vmem:[%s1 + $0x20] sm:$0xff]
  %v119 = vld [vmem:[%s1 + $0x28] sm:$0xff]
  %v120 = vld [vmem:[%s1 + $0x30] sm:$0xff]
  %v121 = vld [vmem:[%s1 + $0x38] sm:$0xff]
  %v122 = vld [vmem:[%s1 + $0x40] sm:$0xff]
  %v123 = vld [vmem:[%s1 + $0x48] sm:$0xff]
  %v124 = vld [vmem:[%s1 + $0x50] sm:$0xff]
  %v125 = vld [vmem:[%s1 + $0x58] sm:$0xff]
  %v126 = vld [vmem:[%s1 + $0x60] sm:$0xff]
  %v127 = vld [vmem:[%s1 + $0x68] sm:$0xff]
  %v128 = vld [vmem:[%s1 + $0x70] sm:$0xff]
  %v129 = vld [vmem:[%s1 + $0x78] sm:$0xff]
  %v130 = vld [vmem:[%s1 + $0x80] sm:$0xff]
  %v131 = vld [vmem:[%s1 + $0x88] sm:$0xff]
  %v132 = vld [vmem:[%s1 + $0x90] sm:$0xff]
  %v133 = vld [vmem:[%s1 + $0x98] sm:$0xff]
  %v134 = vld [vmem:[%s1 + $0xa0] sm:$0xff]
  %v135 = vld [vmem:[%s1 + $0xa8] sm:$0xff]
  %v136 = vld [vmem:[%s1 + $0xb0] sm:$0xff]
  %v137 = vld [vmem:[%s1 + $0xb8] sm:$0xff]
  %v138 = vld [vmem:[%s1 + $0xc0] sm:$0xff]
  %v139 = vld [vmem:[%s1 + $0xc8] sm:$0xff]
  %v140 = vld [vmem:[%s1 + $0xd0] sm:$0xff]
  %v141 = vld [vmem:[%s1 + $0xd8] sm:$0xff]
  %v142 = vld [vmem:[%s1 + $0xe0] sm:$0xff]
  %v143 = vld [vmem:[%s1 + $0xe8] sm:$0xff]
  %v144 = vld [vmem:[%s1 + $0xf0] sm:$0xff]
  %v145 = vld [vmem:[%s1 + $0xf8] sm:$0xff]
  %v146 = vld [vmem:[%s1 + $0x100] sm:$0xff]
  %v147 = vld [vmem:[%s1 + $0x108] sm:$0xff]
  %v148 = vld [vmem:[%s1 + $0x110] sm:$0xff]
  %v149 = vld [vmem:[%s1 + $0x118] sm:$0xff]
  %v150 = vld [vmem:[%s1 + $0x120] sm:$0xff]
  %v151 = vld [vmem:[%s1 + $0x128] sm:$0xff]
  %v152 = vld [vmem:[%s1 + $0x130] sm:$0xff]
  %v153 = vld [vmem:[%s1 + $0x138] sm:$0xff]
  %v154 = vld [vmem:[%s1 + $0x140] sm:$0xff]
  %v155 = vld [vmem:[%s1 + $0x148] sm:$0xff]
  %v156 = vld [vmem:[%s1 + $0x150] sm:$0xff]
  %v157 = vld [vmem:[%s1 + $0x158] sm:$0xff]
  %v158 = vld [vmem:[%s1 + $0x160] sm:$0xff]
  %v159 = vld [vmem:[%s1 + $0x168] sm:$0xff]
  %v160 = vld [vmem:[%s1 + $0x170] sm:$0xff]
  %v161 = vld [vmem:[%s1 + $0x178] sm:$0xff]
  %v162 = vld [vmem:[%s1 + $0x180] sm:$0xff]
  %v163 = vld [vmem:[%s1 + $0x188] sm:$0xff]
  %v164 = vld [vmem:[%s1 + $0x190] sm:$0xff]
  %v165 = vld [vmem:[%s1 + $0x198] sm:$0xff]
  %v166 = vld [vmem:[%s1 + $0x1a0] sm:$0xff]
  %v167 = vld [vmem:[%s1 + $0x1a8] sm:$0xff]
  %v168 = vld [vmem:[%s1 + $0x1b0] sm:$0xff]
  %v169 = vld [vmem:[%s1 + $0x1b8] sm:$0xff]
  %v170 = vld [vmem:[%s1 + $0x1c0] sm:$0xff]
  %v171 = vld [vmem:[%s1 + $0x1c8] sm:$0xff]
  %v172 = vld [vmem:[%s1 + $0x1d0] sm:$0xff]
  %v173 = vld [vmem:[%s1 + $0x1d8] sm:$0xff]
  %v174 = vld [vmem:[%s1 + $0x1e0] sm:$0xff]
  %v175 = vld [vmem:[%s1 + $0x1e8] sm:$0xff]
  %v176 = vld [vmem:[%s1 + $0x1f0] sm:$0xff]
  %v177 = vld [vmem:[%s1 + $0x1f8] sm:$0xff]
  %v178 = vld [vmem:[%s1 + $0x200] sm:$0xff]
  %v179 = vld [vmem:[%s1 + $0x208] sm:$0xff]
  %v180 = vld [vmem:[%s1 + $0x210] sm:$0xff]
  %v181 = vld [vmem:[%s1 + $0x218] sm:$0xff]
  %v182 = vld [vmem:[%s1 + $0x220] sm:$0xff]
  %v183 = vld [vmem:[%s1 + $0x228] sm:$0xff]
  %v184 = vld [vmem:[%s1 + $0x230] sm:$0xff]
  %v185 = vld [vmem:[%s1 + $0x238] sm:$0xff]
  %v186 = vld [vmem:[%s1 + $0x240] sm:$0xff]
  %v187 = vld [vmem:[%s1 + $0x248] sm:$0xff]
  %v188 = vld [vmem:[%s1 + $0x250] sm:$0xff]
  %v189 = vld [vmem:[%s1 + $0x258] sm:$0xff]
  %v190 = vld [vmem:[%s1 + $0x260] sm:$0xff]
  %v191 = vld [vmem:[%s1 + $0x268] sm:$0xff]
  %v192 = vld [vmem:[%s1 + $0x270] sm:$0xff]
  %v193 = vld [vmem:[%s1 + $0x278] sm:$0xff]
  %v194 = vld [vmem:[%s2] sm:$0x3]
  %v196 = vlaneseq
  %v197 = vshrl.u32 %v196, 7
  %v198 = vsub.s32 0, %v197
  %v199 = vrot.slane %v194, %v198
  %v200 = vlaneseq
  %v201 = vshrl.u32 %v200, 7
  %v202 = vsub.s32 1, %v201
  %v203 = vrot.slane %v194, %v202
  %v254 = vunpack.c.l.b16 %v66
  %v255 = vunpack.c.h.b16 %v66
  %v256 = vunpack.c.l.b16 %v67
  %v257 = vunpack.c.h.b16 %v67
  %v258 = vunpack.c.l.b16 %v68
  %v259 = vunpack.c.l.b16 %v69
  %v260 = vunpack.c.h.b16 %v69
  %v261 = vunpack.c.l.b16 %v70
  %v262 = vunpack.c.h.b16 %v70
  %v263 = vunpack.c.l.b16 %v71
  %v264 = vunpack.c.l.b16 %v72
  %v265 = vunpack.c.h.b16 %v72
  %v266 = vunpack.c.l.b16 %v73
  %v267 = vunpack.c.h.b16 %v73
  %v268 = vunpack.c.l.b16 %v74
  %v269 = vunpack.c.l.b16 %v75
  %v270 = vunpack.c.h.b16 %v75
  %v271 = vunpack.c.l.b16 %v76
  %v272 = vunpack.c.h.b16 %v76
  %v273 = vunpack.c.l.b16 %v77
  %v274 = vunpack.c.l.b16 %v78
  %v275 = vunpack.c.h.b16 %v78
  %v276 = vunpack.c.l.b16 %v79
  %v277 = vunpack.c.h.b16 %v79
  %v278 = vunpack.c.l.b16 %v80
  %v279 = vunpack.c.l.b16 %v81
  %v280 = vunpack.c.h.b16 %v81
  %v281 = vunpack.c.l.b16 %v82
  %v282 = vunpack.c.h.b16 %v82
  %v283 = vunpack.c.l.b16 %v83
  %v284 = vunpack.c.l.b16 %v84
  %v285 = vunpack.c.h.b16 %v84
  %v286 = vunpack.c.l.b16 %v85
  %v287 = vunpack.c.h.b16 %v85
  %v288 = vunpack.c.l.b16 %v86
  %v289 = vunpack.c.l.b16 %v87
  %v290 = vunpack.c.h.b16 %v87
  %v291 = vunpack.c.l.b16 %v88
  %v292 = vunpack.c.h.b16 %v88
  %v293 = vunpack.c.l.b16 %v89
  %v294 = vunpack.c.l.b16 %v90
  %v295 = vunpack.c.h.b16 %v90
  %v296 = vunpack.c.l.b16 %v91
  %v297 = vunpack.c.h.b16 %v91
  %v298 = vunpack.c.l.b16 %v92
  %v299 = vunpack.c.l.b16 %v93
  %v300 = vunpack.c.h.b16 %v93
  %v301 = vunpack.c.l.b16 %v94
  %v302 = vunpack.c.h.b16 %v94
  %v303 = vunpack.c.l.b16 %v95
  %v304 = vunpack.c.l.b16 %v96
  %v305 = vunpack.c.h.b16 %v96
  %v306 = vunpack.c.l.b16 %v97
  %v307 = vunpack.c.h.b16 %v97
  %v308 = vunpack.c.l.b16 %v98
  %v309 = vunpack.c.l.b16 %v99
  %v310 = vunpack.c.h.b16 %v99
  %v311 = vunpack.c.l.b16 %v100
  %v312 = vunpack.c.h.b16 %v100
  %v313 = vunpack.c.l.b16 %v101
  %v314 = vunpack.c.l.b16 %v102
  %v315 = vunpack.c.h.b16 %v102
  %v316 = vunpack.c.l.b16 %v103
  %v317 = vunpack.c.h.b16 %v103
  %v318 = vunpack.c.l.b16 %v104
  %v319 = vunpack.c.l.b16 %v105
  %v320 = vunpack.c.h.b16 %v105
  %v321 = vunpack.c.l.b16 %v106
  %v322 = vunpack.c.h.b16 %v106
  %v323 = vunpack.c.l.b16 %v107
  %v324 = vunpack.c.l.b16 %v108
  %v325 = vunpack.c.h.b16 %v108
  %v326 = vunpack.c.l.b16 %v109
  %v327 = vunpack.c.h.b16 %v109
  %v328 = vunpack.c.l.b16 %v110
  %v329 = vunpack.c.l.b16 %v111
  %v330 = vunpack.c.h.b16 %v111
  %v331 = vunpack.c.l.b16 %v112
  %v332 = vunpack.c.h.b16 %v112
  %v333 = vunpack.c.l.b16 %v113
  %v334 = vpack.c.b16 %v259, %v254
  %v335 = vpack.c.b16 %v260, %v255
  %v336 = vpack.c.b16 %v261, %v256
  %v337 = vpack.c.b16 %v262, %v257
  %v338 = vpack.c.b16 %v263, %v258
  %v339 = vpack.c.b16 %v269, %v264
  %v340 = vpack.c.b16 %v270, %v265
  %v341 = vpack.c.b16 %v271, %v266
  %v342 = vpack.c.b16 %v272, %v267
  %v343 = vpack.c.b16 %v273, %v268
  %v344 = vpack.c.b16 %v279, %v274
  %v345 = vpack.c.b16 %v280, %v275
  %v346 = vpack.c.b16 %v281, %v276
  %v347 = vpack.c.b16 %v282, %v277
  %v348 = vpack.c.b16 %v283, %v278
  %v349 = vpack.c.b16 %v289, %v284
  %v350 = vpack.c.b16 %v290, %v285
  %v351 = vpack.c.b16 %v291, %v286
  %v352 = vpack.c.b16 %v292, %v287
  %v353 = vpack.c.b16 %v293, %v288
  %v354 = vpack.c.b16 %v299, %v294
  %v355 = vpack.c.b16 %v300, %v295
  %v356 = vpack.c.b16 %v301, %v296
  %v357 = vpack.c.b16 %v302, %v297
  %v358 = vpack.c.b16 %v303, %v298
  %v359 = vpack.c.b16 %v309, %v304
  %v360 = vpack.c.b16 %v310, %v305
  %v361 = vpack.c.b16 %v311, %v306
  %v362 = vpack.c.b16 %v312, %v307
  %v363 = vpack.c.b16 %v313, %v308
  %v364 = vpack.c.b16 %v319, %v314
  %v365 = vpack.c.b16 %v320, %v315
  %v366 = vpack.c.b16 %v321, %v316
  %v367 = vpack.c.b16 %v322, %v317
  %v368 = vpack.c.b16 %v323, %v318
  %v369 = vpack.c.b16 %v329, %v324
  %v370 = vpack.c.b16 %v330, %v325
  %v371 = vpack.c.b16 %v331, %v326
  %v372 = vpack.c.b16 %v332, %v327
  %v373 = vpack.c.b16 %v333, %v328
  %v494 = vunpack.c.l.b16 %v114
  %v495 = vunpack.c.h.b16 %v114
  %v496 = vunpack.c.l.b16 %v115
  %v497 = vunpack.c.h.b16 %v115
  %v498 = vunpack.c.l.b16 %v116
  %v499 = vunpack.c.h.b16 %v116
  %v500 = vunpack.c.l.b16 %v117
  %v501 = vunpack.c.h.b16 %v117
  %v502 = vunpack.c.l.b16 %v118
  %v503 = vunpack.c.h.b16 %v118
  %v504 = vunpack.c.l.b16 %v119
  %v505 = vunpack.c.h.b16 %v119
  %v506 = vunpack.c.l.b16 %v120
  %v507 = vunpack.c.h.b16 %v120
  %v508 = vunpack.c.l.b16 %v121
  %v509 = vunpack.c.h.b16 %v121
  %v510 = vunpack.c.l.b16 %v122
  %v511 = vunpack.c.h.b16 %v122
  %v512 = vunpack.c.l.b16 %v123
  %v513 = vunpack.c.h.b16 %v123
  %v514 = vunpack.c.l.b16 %v124
  %v515 = vunpack.c.h.b16 %v124
  %v516 = vunpack.c.l.b16 %v125
  %v517 = vunpack.c.h.b16 %v125
  %v518 = vunpack.c.l.b16 %v126
  %v519 = vunpack.c.h.b16 %v126
  %v520 = vunpack.c.l.b16 %v127
  %v521 = vunpack.c.h.b16 %v127
  %v522 = vunpack.c.l.b16 %v128
  %v523 = vunpack.c.h.b16 %v128
  %v524 = vunpack.c.l.b16 %v129
  %v525 = vunpack.c.h.b16 %v129
  %v526 = vunpack.c.l.b16 %v130
  %v527 = vunpack.c.h.b16 %v130
  %v528 = vunpack.c.l.b16 %v131
  %v529 = vunpack.c.h.b16 %v131
  %v530 = vunpack.c.l.b16 %v132
  %v531 = vunpack.c.h.b16 %v132
  %v532 = vunpack.c.l.b16 %v133
  %v533 = vunpack.c.h.b16 %v133
  %v534 = vunpack.c.l.b16 %v134
  %v535 = vunpack.c.h.b16 %v134
  %v536 = vunpack.c.l.b16 %v135
  %v537 = vunpack.c.h.b16 %v135
  %v538 = vunpack.c.l.b16 %v136
  %v539 = vunpack.c.h.b16 %v136
  %v540 = vunpack.c.l.b16 %v137
  %v541 = vunpack.c.h.b16 %v137
  %v542 = vunpack.c.l.b16 %v138
  %v543 = vunpack.c.h.b16 %v138
  %v544 = vunpack.c.l.b16 %v139
  %v545 = vunpack.c.h.b16 %v139
  %v546 = vunpack.c.l.b16 %v140
  %v547 = vunpack.c.h.b16 %v140
  %v548 = vunpack.c.l.b16 %v141
  %v549 = vunpack.c.h.b16 %v141
  %v550 = vunpack.c.l.b16 %v142
  %v551 = vunpack.c.h.b16 %v142
  %v552 = vunpack.c.l.b16 %v143
  %v553 = vunpack.c.h.b16 %v143
  %v554 = vunpack.c.l.b16 %v144
  %v555 = vunpack.c.h.b16 %v144
  %v556 = vunpack.c.l.b16 %v145
  %v557 = vunpack.c.h.b16 %v145
  %v558 = vunpack.c.l.b16 %v146
  %v559 = vunpack.c.h.b16 %v146
  %v560 = vunpack.c.l.b16 %v147
  %v561 = vunpack.c.h.b16 %v147
  %v562 = vunpack.c.l.b16 %v148
  %v563 = vunpack.c.h.b16 %v148
  %v564 = vunpack.c.l.b16 %v149
  %v565 = vunpack.c.h.b16 %v149
  %v566 = vunpack.c.l.b16 %v150
  %v567 = vunpack.c.h.b16 %v150
  %v568 = vunpack.c.l.b16 %v151
  %v569 = vunpack.c.h.b16 %v151
  %v570 = vunpack.c.l.b16 %v152
  %v571 = vunpack.c.h.b16 %v152
  %v572 = vunpack.c.l.b16 %v153
  %v573 = vunpack.c.h.b16 %v153
  %v574 = vunpack.c.l.b16 %v154
  %v575 = vunpack.c.h.b16 %v154
  %v576 = vunpack.c.l.b16 %v155
  %v577 = vunpack.c.h.b16 %v155
  %v578 = vunpack.c.l.b16 %v156
  %v579 = vunpack.c.h.b16 %v156
  %v580 = vunpack.c.l.b16 %v157
  %v581 = vunpack.c.h.b16 %v157
  %v582 = vunpack.c.l.b16 %v158
  %v583 = vunpack.c.h.b16 %v158
  %v584 = vunpack.c.l.b16 %v159
  %v585 = vunpack.c.h.b16 %v159
  %v586 = vunpack.c.l.b16 %v160
  %v587 = vunpack.c.h.b16 %v160
  %v588 = vunpack.c.l.b16 %v161
  %v589 = vunpack.c.h.b16 %v161
  %v590 = vunpack.c.l.b16 %v162
  %v591 = vunpack.c.h.b16 %v162
  %v592 = vunpack.c.l.b16 %v163
  %v593 = vunpack.c.h.b16 %v163
  %v594 = vunpack.c.l.b16 %v164
  %v595 = vunpack.c.h.b16 %v164
  %v596 = vunpack.c.l.b16 %v165
  %v597 = vunpack.c.h.b16 %v165
  %v598 = vunpack.c.l.b16 %v166
  %v599 = vunpack.c.h.b16 %v166
  %v600 = vunpack.c.l.b16 %v167
  %v601 = vunpack.c.h.b16 %v167
  %v602 = vunpack.c.l.b16 %v168
  %v603 = vunpack.c.h.b16 %v168
  %v604 = vunpack.c.l.b16 %v169
  %v605 = vunpack.c.h.b16 %v169
  %v606 = vunpack.c.l.b16 %v170
  %v607 = vunpack.c.h.b16 %v170
  %v608 = vunpack.c.l.b16 %v171
  %v609 = vunpack.c.h.b16 %v171
  %v610 = vunpack.c.l.b16 %v172
  %v611 = vunpack.c.h.b16 %v172
  %v612 = vunpack.c.l.b16 %v173
  %v613 = vunpack.c.h.b16 %v173
  %v614 = vunpack.c.l.b16 %v174
  %v615 = vunpack.c.h.b16 %v174
  %v616 = vunpack.c.l.b16 %v175
  %v617 = vunpack.c.h.b16 %v175
  %v618 = vunpack.c.l.b16 %v176
  %v619 = vunpack.c.h.b16 %v176
  %v620 = vunpack.c.l.b16 %v177
  %v621 = vunpack.c.h.b16 %v177
  %v622 = vunpack.c.l.b16 %v178
  %v623 = vunpack.c.h.b16 %v178
  %v624 = vunpack.c.l.b16 %v179
  %v625 = vunpack.c.h.b16 %v179
  %v626 = vunpack.c.l.b16 %v180
  %v627 = vunpack.c.h.b16 %v180
  %v628 = vunpack.c.l.b16 %v181
  %v629 = vunpack.c.h.b16 %v181
  %v630 = vunpack.c.l.b16 %v182
  %v631 = vunpack.c.h.b16 %v182
  %v632 = vunpack.c.l.b16 %v183
  %v633 = vunpack.c.h.b16 %v183
  %v634 = vunpack.c.l.b16 %v184
  %v635 = vunpack.c.h.b16 %v184
  %v636 = vunpack.c.l.b16 %v185
  %v637 = vunpack.c.h.b16 %v185
  %v638 = vunpack.c.l.b16 %v186
  %v639 = vunpack.c.h.b16 %v186
  %v640 = vunpack.c.l.b16 %v187
  %v641 = vunpack.c.h.b16 %v187
  %v642 = vunpack.c.l.b16 %v188
  %v643 = vunpack.c.h.b16 %v188
  %v644 = vunpack.c.l.b16 %v189
  %v645 = vunpack.c.h.b16 %v189
  %v646 = vunpack.c.l.b16 %v190
  %v647 = vunpack.c.h.b16 %v190
  %v648 = vunpack.c.l.b16 %v191
  %v649 = vunpack.c.h.b16 %v191
  %v650 = vunpack.c.l.b16 %v192
  %v651 = vunpack.c.h.b16 %v192
  %v652 = vunpack.c.l.b16 %v193
  %v653 = vunpack.c.h.b16 %v193
  %v654 = vpack.c.b16 %v496, %v494
  %v655 = vpack.c.b16 %v497, %v495
  %v656 = vpack.c.b16 %v500, %v498
  %v657 = vpack.c.b16 %v501, %v499
  %v658 = vpack.c.b16 %v504, %v502
  %v659 = vpack.c.b16 %v505, %v503
  %v660 = vpack.c.b16 %v508, %v506
  %v661 = vpack.c.b16 %v509, %v507
  %v662 = vpack.c.b16 %v512, %v510
  %v663 = vpack.c.b16 %v513, %v511
  %v664 = vpack.c.b16 %v516, %v514
  %v665 = vpack.c.b16 %v517, %v515
  %v666 = vpack.c.b16 %v520, %v518
  %v667 = vpack.c.b16 %v521, %v519
  %v668 = vpack.c.b16 %v524, %v522
  %v669 = vpack.c.b16 %v525, %v523
  %v670 = vpack.c.b16 %v528, %v526
  %v671 = vpack.c.b16 %v529, %v527
  %v672 = vpack.c.b16 %v532, %v530
  %v673 = vpack.c.b16 %v533, %v531
  %v674 = vpack.c.b16 %v536, %v534
  %v675 = vpack.c.b16 %v537, %v535
  %v676 = vpack.c.b16 %v540, %v538
  %v677 = vpack.c.b16 %v541, %v539
  %v678 = vpack.c.b16 %v544, %v542
  %v679 = vpack.c.b16 %v545, %v543
  %v680 = vpack.c.b16 %v548, %v546
  %v681 = vpack.c.b16 %v549, %v547
  %v682 = vpack.c.b16 %v552, %v550
  %v683 = vpack.c.b16 %v553, %v551
  %v684 = vpack.c.b16 %v556, %v554
  %v685 = vpack.c.b16 %v557, %v555
  %v686 = vpack.c.b16 %v560, %v558
  %v687 = vpack.c.b16 %v561, %v559
  %v688 = vpack.c.b16 %v564, %v562
  %v689 = vpack.c.b16 %v565, %v563
  %v690 = vpack.c.b16 %v568, %v566
  %v691 = vpack.c.b16 %v569, %v567
  %v692 = vpack.c.b16 %v572, %v570
  %v693 = vpack.c.b16 %v573, %v571
  %v694 = vpack.c.b16 %v576, %v574
  %v695 = vpack.c.b16 %v577, %v575
  %v696 = vpack.c.b16 %v580, %v578
  %v697 = vpack.c.b16 %v581, %v579
  %v698 = vpack.c.b16 %v584, %v582
  %v699 = vpack.c.b16 %v585, %v583
  %v700 = vpack.c.b16 %v588, %v586
  %v701 = vpack.c.b16 %v589, %v587
  %v702 = vpack.c.b16 %v592, %v590
  %v703 = vpack.c.b16 %v593, %v591
  %v704 = vpack.c.b16 %v596, %v594
  %v705 = vpack.c.b16 %v597, %v595
  %v706 = vpack.c.b16 %v600, %v598
  %v707 = vpack.c.b16 %v601, %v599
  %v708 = vpack.c.b16 %v604, %v602
  %v709 = vpack.c.b16 %v605, %v603
  %v710 = vpack.c.b16 %v608, %v606
  %v711 = vpack.c.b16 %v609, %v607
  %v712 = vpack.c.b16 %v612, %v610
  %v713 = vpack.c.b16 %v613, %v611
  %v714 = vpack.c.b16 %v616, %v614
  %v715 = vpack.c.b16 %v617, %v615
  %v716 = vpack.c.b16 %v620, %v618
  %v717 = vpack.c.b16 %v621, %v619
  %v718 = vpack.c.b16 %v624, %v622
  %v719 = vpack.c.b16 %v625, %v623
  %v720 = vpack.c.b16 %v628, %v626
  %v721 = vpack.c.b16 %v629, %v627
  %v722 = vpack.c.b16 %v632, %v630
  %v723 = vpack.c.b16 %v633, %v631
  %v724 = vpack.c.b16 %v636, %v634
  %v725 = vpack.c.b16 %v637, %v635
  %v726 = vpack.c.b16 %v640, %v638
  %v727 = vpack.c.b16 %v641, %v639
  %v728 = vpack.c.b16 %v644, %v642
  %v729 = vpack.c.b16 %v645, %v643
  %v730 = vpack.c.b16 %v648, %v646
  %v731 = vpack.c.b16 %v649, %v647
  %v732 = vpack.c.b16 %v652, %v650
  %v733 = vpack.c.b16 %v653, %v651
  %814 = vmatprep.subr.bf16.mxu0 %v655
  %815 = vmatpush1.bf16.msra.mxu0 %v654
  %816 = vmatprep.subr.bf16.mxu0 %v657
  %817 = vmatpush1.bf16.msra.mxu0 %v656
  %818 = vmatprep.subr.bf16.mxu0 %v659
  %819 = vmatpush1.bf16.msra.mxu0 %v658
  %820 = vmatprep.subr.bf16.mxu0 %v661
  %821 = vmatpush1.bf16.msra.mxu0 %v660
  %822 = vmatprep.subr.bf16.mxu0 %v663
  %823 = vmatpush1.bf16.msra.mxu0 %v662
  %824 = vmatprep.subr.bf16.mxu0 %v665
  %825 = vmatpush1.bf16.msra.mxu0 %v664
  %826 = vmatprep.subr.bf16.mxu0 %v667
  %827 = vmatpush1.bf16.msra.mxu0 %v666
  %828 = vmatprep.subr.bf16.mxu0 %v669
  %829 = vmatpush1.bf16.msra.mxu0 %v668
  %830 = vmatprep.subr.bf16.mxu0 %v671
  %831 = vmatpush1.bf16.msra.mxu0 %v670
  %832 = vmatprep.subr.bf16.mxu0 %v673
  %833 = vmatpush1.bf16.msra.mxu0 %v672
  %834 = vmatprep.subr.bf16.mxu0 %v675
  %835 = vmatpush1.bf16.msra.mxu0 %v674
  %836 = vmatprep.subr.bf16.mxu0 %v677
  %837 = vmatpush1.bf16.msra.mxu0 %v676
  %838 = vmatprep.subr.bf16.mxu0 %v679
  %839 = vmatpush1.bf16.msra.mxu0 %v678
  %840 = vmatprep.subr.bf16.mxu0 %v681
  %841 = vmatpush1.bf16.msra.mxu0 %v680
  %842 = vmatprep.subr.bf16.mxu0 %v683
  %843 = vmatpush1.bf16.msra.mxu0 %v682
  %844 = vmatprep.subr.bf16.mxu0 %v685
  %845 = vmatpush1.bf16.msra.mxu0 %v684
  %846 = vmatprep.mubr.bf16.mxu0 %v335
  %847 = vmatmul.mubr.bf16.gmra.mrb[0].mxu0 %v334
  %v848 = vpop.f32.mrb[0].mxu0
  %v849 = vadd.f32 %v199, %v848
  %v850 = vpop.f32.mrb[0].mxu0
  %v851 = vadd.f32 %v203, %v850
  %v852 = vpop.f32.mrb[0].mxu0
  %v853 = vadd.f32 %v199, %v852
  %v854 = vpop.f32.mrb[0].mxu0
  %v855 = vadd.f32 %v203, %v854
  %856 = vmatprep.mubr.bf16.mxu0 %v340
  %857 = vmatmul.mubr.bf16.gmra.mrb[0].mxu0 %v339
  %v858 = vpop.f32.mrb[0].mxu0
  %v859 = vadd.f32 %v199, %v858
  %v860 = vpop.f32.mrb[0].mxu0
  %v861 = vadd.f32 %v203, %v860
  %v862 = vpop.f32.mrb[0].mxu0
  %v863 = vadd.f32 %v199, %v862
  %v864 = vpop.f32.mrb[0].mxu0
  %v865 = vadd.f32 %v203, %v864
  %866 = vmatprep.mubr.bf16.mxu0 %v345
  %867 = vmatmul.mubr.bf16.gmra.mrb[0].mxu0 %v344
  %v868 = vpop.f32.mrb[0].mxu0
  %v869 = vadd.f32 %v199, %v868
  %v870 = vpop.f32.mrb[0].mxu0
  %v871 = vadd.f32 %v203, %v870
  %v872 = vpop.f32.mrb[0].mxu0
  %v873 = vadd.f32 %v199, %v872
  %v874 = vpop.f32.mrb[0].mxu0
  %v875 = vadd.f32 %v203, %v874
  %876 = vmatprep.mubr.bf16.mxu0 %v350
  %877 = vmatmul.mubr.bf16.gmra.mrb[0].mxu0 %v349
  %v878 = vpop.f32.mrb[0].mxu0
  %v879 = vadd.f32 %v199, %v878
  %v880 = vpop.f32.mrb[0].mxu0
  %v881 = vadd.f32 %v203, %v880
  %v882 = vpop.f32.mrb[0].mxu0
  %v883 = vadd.f32 %v199, %v882
  %v884 = vpop.f32.mrb[0].mxu0
  %v885 = vadd.f32 %v203, %v884
  %886 = vmatprep.mubr.bf16.mxu0 %v355
  %887 = vmatmul.mubr.bf16.gmra.mrb[0].mxu0 %v354
  %v888 = vpop.f32.mrb[0].mxu0
  %v889 = vadd.f32 %v199, %v888
  %v890 = vpop.f32.mrb[0].mxu0
  %v891 = vadd.f32 %v203, %v890
  %v892 = vpop.f32.mrb[0].mxu0
  %v893 = vadd.f32 %v199, %v892
  %v894 = vpop.f32.mrb[0].mxu0
  %v895 = vadd.f32 %v203, %v894
  %896 = vmatprep.mubr.bf16.mxu0 %v360
  %897 = vmatmul.mubr.bf16.gmra.mrb[0].mxu0 %v359
  %v898 = vpop.f32.mrb[0].mxu0
  %v899 = vadd.f32 %v199, %v898
  %v900 = vpop.f32.mrb[0].mxu0
  %v901 = vadd.f32 %v203, %v900
  %v902 = vpop.f32.mrb[0].mxu0
  %v903 = vadd.f32 %v199, %v902
  %v904 = vpop.f32.mrb[0].mxu0
  %v905 = vadd.f32 %v203, %v904
  %906 = vmatprep.mubr.bf16.mxu0 %v365
  %907 = vmatmul.mubr.bf16.gmra.mrb[0].mxu0 %v364
  %v908 = vpop.f32.mrb[0].mxu0
  %v909 = vadd.f32 %v199, %v908
  %v910 = vpop.f32.mrb[0].mxu0
  %v911 = vadd.f32 %v203, %v910
  %v912 = vpop.f32.mrb[0].mxu0
  %v913 = vadd.f32 %v199, %v912
  %v914 = vpop.f32.mrb[0].mxu0
  %v915 = vadd.f32 %v203, %v914
  %916 = vmatprep.mubr.bf16.mxu0 %v370
  %917 = vmatmul.mubr.bf16.gmra.mrb[0].mxu0 %v369
  %v918 = vpop.f32.mrb[0].mxu0
  %v919 = vadd.f32 %v199, %v918
  %v920 = vpop.f32.mrb[0].mxu0
  %v921 = vadd.f32 %v203, %v920
  %v922 = vpop.f32.mrb[0].mxu0
  %v923 = vadd.f32 %v199, %v922
  %v924 = vpop.f32.mrb[0].mxu0
  %v925 = vadd.f32 %v203, %v924
  %926 = vdwg.mxu0
  %927 = vmatprep.subr.bf16.mxu0 %v687
  %928 = vmatpush1.bf16.msra.mxu0 %v686
  %929 = vmatprep.subr.bf16.mxu0 %v689
  %930 = vmatpush1.bf16.msra.mxu0 %v688
  %931 = vmatprep.subr.bf16.mxu0 %v691
  %932 = vmatpush1.bf16.msra.mxu0 %v690
  %933 = vmatprep.subr.bf16.mxu0 %v693
  %934 = vmatpush1.bf16.msra.mxu0 %v692
  %935 = vmatprep.subr.bf16.mxu0 %v695
  %936 = vmatpush1.bf16.msra.mxu0 %v694
  %937 = vmatprep.subr.bf16.mxu0 %v697
  %938 = vmatpush1.bf16.msra.mxu0 %v696
  %939 = vmatprep.subr.bf16.mxu0 %v699
  %940 = vmatpush1.bf16.msra.mxu0 %v698
  %941 = vmatprep.subr.bf16.mxu0 %v701
  %942 = vmatpush1.bf16.msra.mxu0 %v700
  %943 = vmatprep.subr.bf16.mxu0 %v703
  %944 = vmatpush1.bf16.msra.mxu0 %v702
  %945 = vmatprep.subr.bf16.mxu0 %v705
  %946 = vmatpush1.bf16.msra.mxu0 %v704
  %947 = vmatprep.subr.bf16.mxu0 %v707
  %948 = vmatpush1.bf16.msra.mxu0 %v706
  %949 = vmatprep.subr.bf16.mxu0 %v709
  %950 = vmatpush1.bf16.msra.mxu0 %v708
  %951 = vmatprep.subr.bf16.mxu0 %v711
  %952 = vmatpush1.bf16.msra.mxu0 %v710
  %953 = vmatprep.subr.bf16.mxu0 %v713
  %954 = vmatpush1.bf16.msra.mxu0 %v712
  %955 = vmatprep.subr.bf16.mxu0 %v715
  %956 = vmatpush1.bf16.msra.mxu0 %v714
  %957 = vmatprep.subr.bf16.mxu0 %v717
  %958 = vmatpush1.bf16.msra.mxu0 %v716
  %959 = vmatprep.mubr.bf16.mxu0 %v337
  %960 = vmatmul.mubr.bf16.gmra.mrb[0].mxu0 %v336
  %v961 = vpop.f32.mrb[0].mxu0
  %v962 = vadd.f32 %v849, %v961
  %v963 = vpop.f32.mrb[0].mxu0
  %v964 = vadd.f32 %v851, %v963
  %v965 = vpop.f32.mrb[0].mxu0
  %v966 = vadd.f32 %v853, %v965
  %v967 = vpop.f32.mrb[0].mxu0
  %v968 = vadd.f32 %v855, %v967
  %969 = vmatprep.mubr.bf16.mxu0 %v342
  %970 = vmatmul.mubr.bf16.gmra.mrb[0].mxu0 %v341
  %v971 = vpop.f32.mrb[0].mxu0
  %v972 = vadd.f32 %v859, %v971
  %v973 = vpop.f32.mrb[0].mxu0
  %v974 = vadd.f32 %v861, %v973
  %v975 = vpop.f32.mrb[0].mxu0
  %v976 = vadd.f32 %v863, %v975
  %v977 = vpop.f32.mrb[0].mxu0
  %v978 = vadd.f32 %v865, %v977
  %979 = vmatprep.mubr.bf16.mxu0 %v347
  %980 = vmatmul.mubr.bf16.gmra.mrb[0].mxu0 %v346
  %v981 = vpop.f32.mrb[0].mxu0
  %v982 = vadd.f32 %v869, %v981
  %v983 = vpop.f32.mrb[0].mxu0
  %v984 = vadd.f32 %v871, %v983
  %v985 = vpop.f32.mrb[0].mxu0
  %v986 = vadd.f32 %v873, %v985
  %v987 = vpop.f32.mrb[0].mxu0
  %v988 = vadd.f32 %v875, %v987
  %989 = vmatprep.mubr.bf16.mxu0 %v352
  %990 = vmatmul.mubr.bf16.gmra.mrb[0].mxu0 %v351
  %v991 = vpop.f32.mrb[0].mxu0
  %v992 = vadd.f32 %v879, %v991
  %v993 = vpop.f32.mrb[0].mxu0
  %v994 = vadd.f32 %v881, %v993
  %v995 = vpop.f32.mrb[0].mxu0
  %v996 = vadd.f32 %v883, %v995
  %v997 = vpop.f32.mrb[0].mxu0
  %v998 = vadd.f32 %v885, %v997
  %999 = vmatprep.mubr.bf16.mxu0 %v357
  %1000 = vmatmul.mubr.bf16.gmra.mrb[0].mxu0 %v356
  %v1001 = vpop.f32.mrb[0].mxu0
  %v1002 = vadd.f32 %v889, %v1001
  %v1003 = vpop.f32.mrb[0].mxu0
  %v1004 = vadd.f32 %v891, %v1003
  %v1005 = vpop.f32.mrb[0].mxu0
  %v1006 = vadd.f32 %v893, %v1005
  %v1007 = vpop.f32.mrb[0].mxu0
  %v1008 = vadd.f32 %v895, %v1007
  %1009 = vmatprep.mubr.bf16.mxu0 %v362
  %1010 = vmatmul.mubr.bf16.gmra.mrb[0].mxu0 %v361
  %v1011 = vpop.f32.mrb[0].mxu0
  %v1012 = vadd.f32 %v899, %v1011
  %v1013 = vpop.f32.mrb[0].mxu0
  %v1014 = vadd.f32 %v901, %v1013
  %v1015 = vpop.f32.mrb[0].mxu0
  %v1016 = vadd.f32 %v903, %v1015
  %v1017 = vpop.f32.mrb[0].mxu0
  %v1018 = vadd.f32 %v905, %v1017
  %1019 = vmatprep.mubr.bf16.mxu0 %v367
  %1020 = vmatmul.mubr.bf16.gmra.mrb[0].mxu0 %v366
  %v1021 = vpop.f32.mrb[0].mxu0
  %v1022 = vadd.f32 %v909, %v1021
  %v1023 = vpop.f32.mrb[0].mxu0
  %v1024 = vadd.f32 %v911, %v1023
  %v1025 = vpop.f32.mrb[0].mxu0
  %v1026 = vadd.f32 %v913, %v1025
  %v1027 = vpop.f32.mrb[0].mxu0
  %v1028 = vadd.f32 %v915, %v1027
  %1029 = vmatprep.mubr.bf16.mxu0 %v372
  %1030 = vmatmul.mubr.bf16.gmra.mrb[0].mxu0 %v371
  %v1031 = vpop.f32.mrb[0].mxu0
  %v1032 = vadd.f32 %v919, %v1031
  %v1033 = vpop.f32.mrb[0].mxu0
  %v1034 = vadd.f32 %v921, %v1033
  %v1035 = vpop.f32.mrb[0].mxu0
  %v1036 = vadd.f32 %v923, %v1035
  %v1037 = vpop.f32.mrb[0].mxu0
  %v1038 = vadd.f32 %v925, %v1037
  %1039 = vdwg.mxu0
  %1040 = vmatprep.subr.bf16.mxu0 %v719
  %1041 = vmatpush1.bf16.msra.mxu0 %v718
  %1042 = vmatprep.subr.bf16.mxu0 %v721
  %1043 = vmatpush1.bf16.msra.mxu0 %v720
  %1044 = vmatprep.subr.bf16.mxu0 %v723
  %1045 = vmatpush1.bf16.msra.mxu0 %v722
  %1046 = vmatprep.subr.bf16.mxu0 %v725
  %1047 = vmatpush1.bf16.msra.mxu0 %v724
  %1048 = vmatprep.subr.bf16.mxu0 %v727
  %1049 = vmatpush1.bf16.msra.mxu0 %v726
  %1050 = vmatprep.subr.bf16.mxu0 %v729
  %1051 = vmatpush1.bf16.msra.mxu0 %v728
  %1052 = vmatprep.subr.bf16.mxu0 %v731
  %1053 = vmatpush1.bf16.msra.mxu0 %v730
  %1054 = vmatprep.subr.bf16.mxu0 %v733
  %1055 = vmatpush1.bf16.msra.mxu0 %v732
  %1056 = vmatprep.subr.bf16.mxu0 0
  %1057 = vmatpush1.bf16.msra.mxu0 0
  %1058 = vmatprep.subr.bf16.mxu0 0
  %1059 = vmatpush1.bf16.msra.mxu0 0
  %1060 = vmatprep.subr.bf16.mxu0 0
  %1061 = vmatpush1.bf16.msra.mxu0 0
  %1062 = vmatprep.subr.bf16.mxu0 0
  %1063 = vmatpush1.bf16.msra.mxu0 0
  %1064 = vmatprep.subr.bf16.mxu0 0
  %1065 = vmatpush1.bf16.msra.mxu0 0
  %1066 = vmatprep.subr.bf16.mxu0 0
  %1067 = vmatpush1.bf16.msra.mxu0 0
  %1068 = vmatprep.subr.bf16.mxu0 0
  %1069 = vmatpush1.bf16.msra.mxu0 0
  %1070 = vmatprep.subr.bf16.mxu0 0
  %1071 = vmatpush1.bf16.msra.mxu0 0
  %1072 = vmatprep.mubr.bf16.mxu0 0
  %1073 = vmatmul.mubr.bf16.gmra.mrb[0].mxu0 %v338
  %v1074 = vpop.f32.mrb[0].mxu0
  %v1075 = vadd.f32 %v962, %v1074
  %v1076 = vpop.f32.mrb[0].mxu0
  %v1077 = vadd.f32 %v964, %v1076
  %v1078 = vpop.f32.mrb[0].mxu0
  %v1079 = vadd.f32 %v966, %v1078
  %v1080 = vpop.f32.mrb[0].mxu0
  %v1081 = vadd.f32 %v968, %v1080
  %1082 = vmatprep.mubr.bf16.mxu0 0
  %1083 = vmatmul.mubr.bf16.gmra.mrb[0].mxu0 %v343
  %v1084 = vpop.f32.mrb[0].mxu0
  %v1085 = vadd.f32 %v972, %v1084
  %v1086 = vpop.f32.mrb[0].mxu0
  %v1087 = vadd.f32 %v974, %v1086
  %v1088 = vpop.f32.mrb[0].mxu0
  %v1089 = vadd.f32 %v976, %v1088
  %v1090 = vpop.f32.mrb[0].mxu0
  %v1091 = vadd.f32 %v978, %v1090
  %1092 = vmatprep.mubr.bf16.mxu0 0
  %1093 = vmatmul.mubr.bf16.gmra.mrb[0].mxu0 %v348
  %v1094 = vpop.f32.mrb[0].mxu0
  %v1095 = vadd.f32 %v982, %v1094
  %v1096 = vpop.f32.mrb[0].mxu0
  %v1097 = vadd.f32 %v984, %v1096
  %v1098 = vpop.f32.mrb[0].mxu0
  %v1099 = vadd.f32 %v986, %v1098
  %v1100 = vpop.f32.mrb[0].mxu0
  %v1101 = vadd.f32 %v988, %v1100
  %1102 = vmatprep.mubr.bf16.mxu0 0
  %1103 = vmatmul.mubr.bf16.gmra.mrb[0].mxu0 %v353
  %v1104 = vpop.f32.mrb[0].mxu0
  %v1105 = vadd.f32 %v992, %v1104
  %v1106 = vpop.f32.mrb[0].mxu0
  %v1107 = vadd.f32 %v994, %v1106
  %v1108 = vpop.f32.mrb[0].mxu0
  %v1109 = vadd.f32 %v996, %v1108
  %v1110 = vpop.f32.mrb[0].mxu0
  %v1111 = vadd.f32 %v998, %v1110
  %1112 = vmatprep.mubr.bf16.mxu0 0
  %1113 = vmatmul.mubr.bf16.gmra.mrb[0].mxu0 %v358
  %v1114 = vpop.f32.mrb[0].mxu0
  %v1115 = vadd.f32 %v1002, %v1114
  %v1116 = vpop.f32.mrb[0].mxu0
  %v1117 = vadd.f32 %v1004, %v1116
  %v1118 = vpop.f32.mrb[0].mxu0
  %v1119 = vadd.f32 %v1006, %v1118
  %v1120 = vpop.f32.mrb[0].mxu0
  %v1121 = vadd.f32 %v1008, %v1120
  %1122 = vmatprep.mubr.bf16.mxu0 0
  %1123 = vmatmul.mubr.bf16.gmra.mrb[0].mxu0 %v363
  %v1124 = vpop.f32.mrb[0].mxu0
  %v1125 = vadd.f32 %v1012, %v1124
  %v1126 = vpop.f32.mrb[0].mxu0
  %v1127 = vadd.f32 %v1014, %v1126
  %v1128 = vpop.f32.mrb[0].mxu0
  %v1129 = vadd.f32 %v1016, %v1128
  %v1130 = vpop.f32.mrb[0].mxu0
  %v1131 = vadd.f32 %v1018, %v1130
  %1132 = vmatprep.mubr.bf16.mxu0 0
  %1133 = vmatmul.mubr.bf16.gmra.mrb[0].mxu0 %v368
  %v1134 = vpop.f32.mrb[0].mxu0
  %v1135 = vadd.f32 %v1022, %v1134
  %v1136 = vpop.f32.mrb[0].mxu0
  %v1137 = vadd.f32 %v1024, %v1136
  %v1138 = vpop.f32.mrb[0].mxu0
  %v1139 = vadd.f32 %v1026, %v1138
  %v1140 = vpop.f32.mrb[0].mxu0
  %v1141 = vadd.f32 %v1028, %v1140
  %1142 = vmatprep.mubr.bf16.mxu0 0
  %1143 = vmatmul.mubr.bf16.gmra.mrb[0].mxu0 %v373
  %v1144 = vpop.f32.mrb[0].mxu0
  %v1145 = vadd.f32 %v1032, %v1144
  %v1146 = vpop.f32.mrb[0].mxu0
  %v1147 = vadd.f32 %v1034, %v1146
  %v1148 = vpop.f32.mrb[0].mxu0
  %v1149 = vadd.f32 %v1036, %v1148
  %v1150 = vpop.f32.mrb[0].mxu0
  %v1151 = vadd.f32 %v1038, %v1150
  %1152 = vdwg.mxu0
  %v1153 = vld [vmem:[%s3] sm:$0xff]
  %v1154 = vld [vmem:[%s3 + $0x8] sm:$0xff]
  %v1155 = vld [vmem:[%s3 + $0x10] sm:$0xff]
  %v1156 = vld [vmem:[%s3 + $0x18] sm:$0xff]
  %v1157 = vld [vmem:[%s3 + $0x20] sm:$0xff]
  %v1158 = vld [vmem:[%s3 + $0x28] sm:$0xff]
  %v1159 = vld [vmem:[%s3 + $0x30] sm:$0xff]
  %v1160 = vld [vmem:[%s3 + $0x38] sm:$0xff]
  %v1161 = vld [vmem:[%s3 + $0x40] sm:$0xff]
  %v1162 = vld [vmem:[%s3 + $0x48] sm:$0xff]
  %v1163 = vld [vmem:[%s3 + $0x50] sm:$0xff]
  %v1164 = vld [vmem:[%s3 + $0x58] sm:$0xff]
  %v1165 = vld [vmem:[%s3 + $0x60] sm:$0xff]
  %v1166 = vld [vmem:[%s3 + $0x68] sm:$0xff]
  %v1167 = vld [vmem:[%s3 + $0x70] sm:$0xff]
  %v1168 = vld [vmem:[%s3 + $0x78] sm:$0xff]
  %v1169 = vunpack.c.l.bf16 %v1153
  %v1170 = vunpack.c.h.bf16 %v1153
  %v1171 = vunpack.c.l.bf16 %v1154
  %v1172 = vunpack.c.h.bf16 %v1154
  %v1173 = vunpack.c.l.bf16 %v1155
  %v1174 = vunpack.c.h.bf16 %v1155
  %v1175 = vunpack.c.l.bf16 %v1156
  %v1176 = vunpack.c.h.bf16 %v1156
  %v1177 = vunpack.c.l.bf16 %v1157
  %v1178 = vunpack.c.h.bf16 %v1157
  %v1179 = vunpack.c.l.bf16 %v1158
  %v1180 = vunpack.c.h.bf16 %v1158
  %v1181 = vunpack.c.l.bf16 %v1159
  %v1182 = vunpack.c.h.bf16 %v1159
  %v1183 = vunpack.c.l.bf16 %v1160
  %v1184 = vunpack.c.h.bf16 %v1160
  %v1185 = vunpack.c.l.bf16 %v1161
  %v1186 = vunpack.c.h.bf16 %v1161
  %v1187 = vunpack.c.l.bf16 %v1162
  %v1188 = vunpack.c.h.bf16 %v1162
  %v1189 = vunpack.c.l.bf16 %v1163
  %v1190 = vunpack.c.h.bf16 %v1163
  %v1191 = vunpack.c.l.bf16 %v1164
  %v1192 = vunpack.c.h.bf16 %v1164
  %v1193 = vunpack.c.l.bf16 %v1165
  %v1194 = vunpack.c.h.bf16 %v1165
  %v1195 = vunpack.c.l.bf16 %v1166
  %v1196 = vunpack.c.h.bf16 %v1166
  %v1197 = vunpack.c.l.bf16 %v1167
  %v1198 = vunpack.c.h.bf16 %v1167
  %v1199 = vunpack.c.l.bf16 %v1168
  %v1200 = vunpack.c.h.bf16 %v1168
  %v1201 = vmul.f32 %v1075, %v1169
  %v1202 = vmul.f32 %v1077, %v1170
  %v1203 = vmul.f32 %v1079, %v1171
  %v1204 = vmul.f32 %v1081, %v1172
  %v1205 = vmul.f32 %v1085, %v1173
  %v1206 = vmul.f32 %v1087, %v1174
  %v1207 = vmul.f32 %v1089, %v1175
  %v1208 = vmul.f32 %v1091, %v1176
  %v1209 = vmul.f32 %v1095, %v1177
  %v1210 = vmul.f32 %v1097, %v1178
  %v1211 = vmul.f32 %v1099, %v1179
  %v1212 = vmul.f32 %v1101, %v1180
  %v1213 = vmul.f32 %v1105, %v1181
  %v1214 = vmul.f32 %v1107, %v1182
  %v1215 = vmul.f32 %v1109, %v1183
  %v1216 = vmul.f32 %v1111, %v1184
  %v1217 = vmul.f32 %v1115, %v1185
  %v1218 = vmul.f32 %v1117, %v1186
  %v1219 = vmul.f32 %v1119, %v1187
  %v1220 = vmul.f32 %v1121, %v1188
  %v1221 = vmul.f32 %v1125, %v1189
  %v1222 = vmul.f32 %v1127, %v1190
  %v1223 = vmul.f32 %v1129, %v1191
  %v1224 = vmul.f32 %v1131, %v1192
  %v1225 = vmul.f32 %v1135, %v1193
  %v1226 = vmul.f32 %v1137, %v1194
  %v1227 = vmul.f32 %v1139, %v1195
  %v1228 = vmul.f32 %v1141, %v1196
  %v1229 = vmul.f32 %v1145, %v1197
  %v1230 = vmul.f32 %v1147, %v1198
  %v1231 = vmul.f32 %v1149, %v1199
  %v1232 = vmul.f32 %v1151, %v1200
  %v1233 = vadd.f32 %v1201, %v1202
  %1234 = vadd.xlane.f32.xlu0 %v1233
  %v1235 = vpop.xlane.xlu0 %1234
  %v1236 = vadd.f32 %v1203, %v1204
  %1237 = vadd.xlane.f32.xlu0 %v1236
  %v1238 = vpop.xlane.xlu0 %1237
  %v1239 = vadd.f32 %v1205, %v1206
  %1240 = vadd.xlane.f32.xlu0 %v1239
  %v1241 = vpop.xlane.xlu0 %1240
  %v1242 = vadd.f32 %v1207, %v1208
  %1243 = vadd.xlane.f32.xlu0 %v1242
  %v1244 = vpop.xlane.xlu0 %1243
  %v1245 = vadd.f32 %v1209, %v1210
  %1246 = vadd.xlane.f32.xlu0 %v1245
  %v1247 = vpop.xlane.xlu0 %1246
  %v1248 = vadd.f32 %v1211, %v1212
  %1249 = vadd.xlane.f32.xlu0 %v1248
  %v1250 = vpop.xlane.xlu0 %1249
  %v1251 = vadd.f32 %v1213, %v1214
  %1252 = vadd.xlane.f32.xlu0 %v1251
  %v1253 = vpop.xlane.xlu0 %1252
  %v1254 = vadd.f32 %v1215, %v1216
  %1255 = vadd.xlane.f32.xlu0 %v1254
  %v1256 = vpop.xlane.xlu0 %1255
  %v1257 = vadd.f32 %v1217, %v1218
  %1258 = vadd.xlane.f32.xlu0 %v1257
  %v1259 = vpop.xlane.xlu0 %1258
  %v1260 = vadd.f32 %v1219, %v1220
  %1261 = vadd.xlane.f32.xlu0 %v1260
  %v1262 = vpop.xlane.xlu0 %1261
  %v1263 = vadd.f32 %v1221, %v1222
  %1264 = vadd.xlane.f32.xlu0 %v1263
  %v1265 = vpop.xlane.xlu0 %1264
  %v1266 = vadd.f32 %v1223, %v1224
  %1267 = vadd.xlane.f32.xlu0 %v1266
  %v1268 = vpop.xlane.xlu0 %1267
  %v1269 = vadd.f32 %v1225, %v1226
  %1270 = vadd.xlane.f32.xlu0 %v1269
  %v1271 = vpop.xlane.xlu0 %1270
  %v1272 = vadd.f32 %v1227, %v1228
  %1273 = vadd.xlane.f32.xlu0 %v1272
  %v1274 = vpop.xlane.xlu0 %1273
  %v1275 = vadd.f32 %v1229, %v1230
  %1276 = vadd.xlane.f32.xlu0 %v1275
  %v1277 = vpop.xlane.xlu0 %1276
  %v1278 = vadd.f32 %v1231, %v1232
  %1279 = vadd.xlane.f32.xlu0 %v1278
  %v1280 = vpop.xlane.xlu0 %1279
  %v1297 = vlaneseq
  %v1298 = vand.u32 %v1297, 127
  %v1299 = vlaneseq
  %v1300 = vshrl.u32 %v1299, 7
  %v1301 = vsub.s32 %v1298, %v1300
  %v1302 = vrot.slane %v1235, %v1301
  %v1303 = vadd.s32 %v1298, 4294967288
  %v1304 = vlaneseq
  %v1305 = vshrl.u32 %v1304, 7
  %v1306 = vsub.s32 %v1303, %v1305
  %v1307 = vrot.slane %v1238, %v1306
  %vm1308 = vcmask 130112
  %v1309 = vsel %vm1308, %v1307, %v1302
  %v1310 = vadd.s32 %v1298, 4294967280
  %v1311 = vlaneseq
  %v1312 = vshrl.u32 %v1311, 7
  %v1313 = vsub.s32 %v1310, %v1312
  %v1314 = vrot.slane %v1241, %v1313
  %vm1315 = vcmask 195712
  %v1316 = vsel %vm1315, %v1314, %v1309
  %v1317 = vadd.s32 %v1298, 4294967272
  %v1318 = vlaneseq
  %v1319 = vshrl.u32 %v1318, 7
  %v1320 = vsub.s32 %v1317, %v1319
  %v1321 = vrot.slane %v1244, %v1320
  %vm1322 = vcmask 261312
  %v1323 = vsel %vm1322, %v1321, %v1316
  %v1324 = vadd.s32 %v1298, 4294967264
  %v1325 = vlaneseq
  %v1326 = vshrl.u32 %v1325, 7
  %v1327 = vsub.s32 %v1324, %v1326
  %v1328 = vrot.slane %v1247, %v1327
  %vm1329 = vcmask 326912
  %v1330 = vsel %vm1329, %v1328, %v1323
  %v1331 = vadd.s32 %v1298, 4294967256
  %v1332 = vlaneseq
  %v1333 = vshrl.u32 %v1332, 7
  %v1334 = vsub.s32 %v1331, %v1333
  %v1335 = vrot.slane %v1250, %v1334
  %vm1336 = vcmask 392512
  %v1337 = vsel %vm1336, %v1335, %v1330
  %v1338 = vadd.s32 %v1298, 4294967248
  %v1339 = vlaneseq
  %v1340 = vshrl.u32 %v1339, 7
  %v1341 = vsub.s32 %v1338, %v1340
  %v1342 = vrot.slane %v1253, %v1341
  %vm1343 = vcmask 458112
  %v1344 = vsel %vm1343, %v1342, %v1337
  %v1345 = vadd.s32 %v1298, 4294967240
  %v1346 = vlaneseq
  %v1347 = vshrl.u32 %v1346, 7
  %v1348 = vsub.s32 %v1345, %v1347
  %v1349 = vrot.slane %v1256, %v1348
  %vm1350 = vcmask 523712
  %v1351 = vsel %vm1350, %v1349, %v1344
  %v1352 = vadd.s32 %v1298, 4294967232
  %v1353 = vlaneseq
  %v1354 = vshrl.u32 %v1353, 7
  %v1355 = vsub.s32 %v1352, %v1354
  %v1356 = vrot.slane %v1259, %v1355
  %vm1357 = vcmask 589312
  %v1358 = vsel %vm1357, %v1356, %v1351
  %v1359 = vadd.s32 %v1298, 4294967224
  %v1360 = vlaneseq
  %v1361 = vshrl.u32 %v1360, 7
  %v1362 = vsub.s32 %v1359, %v1361
  %v1363 = vrot.slane %v1262, %v1362
  %vm1364 = vcmask 654912
  %v1365 = vsel %vm1364, %v1363, %v1358
  %v1366 = vadd.s32 %v1298, 4294967216
  %v1367 = vlaneseq
  %v1368 = vshrl.u32 %v1367, 7
  %v1369 = vsub.s32 %v1366, %v1368
  %v1370 = vrot.slane %v1265, %v1369
  %vm1371 = vcmask 720512
  %v1372 = vsel %vm1371, %v1370, %v1365
  %v1373 = vadd.s32 %v1298, 4294967208
  %v1374 = vlaneseq
  %v1375 = vshrl.u32 %v1374, 7
  %v1376 = vsub.s32 %v1373, %v1375
  %v1377 = vrot.slane %v1268, %v1376
  %vm1378 = vcmask 786112
  %v1379 = vsel %vm1378, %v1377, %v1372
  %v1380 = vadd.s32 %v1298, 4294967200
  %v1381 = vlaneseq
  %v1382 = vshrl.u32 %v1381, 7
  %v1383 = vsub.s32 %v1380, %v1382
  %v1384 = vrot.slane %v1271, %v1383
  %vm1385 = vcmask 851712
  %v1386 = vsel %vm1385, %v1384, %v1379
  %v1387 = vadd.s32 %v1298, 4294967192
  %v1388 = vlaneseq
  %v1389 = vshrl.u32 %v1388, 7
  %v1390 = vsub.s32 %v1387, %v1389
  %v1391 = vrot.slane %v1274, %v1390
  %vm1392 = vcmask 917312
  %v1393 = vsel %vm1392, %v1391, %v1386
  %v1394 = vadd.s32 %v1298, 4294967184
  %v1395 = vlaneseq
  %v1396 = vshrl.u32 %v1395, 7
  %v1397 = vsub.s32 %v1394, %v1396
  %v1398 = vrot.slane %v1277, %v1397
  %vm1399 = vcmask 982912
  %v1400 = vsel %vm1399, %v1398, %v1393
  %v1401 = vadd.s32 %v1298, 4294967176
  %v1402 = vlaneseq
  %v1403 = vshrl.u32 %v1402, 7
  %v1404 = vsub.s32 %v1401, %v1403
  %v1405 = vrot.slane %v1280, %v1404
  %vm1406 = vcmask 1048512
  %v1407 = vsel %vm1406, %v1405, %v1400
  %1409 = vst [vmem:[%s4] sm:$0x1] %v1407
  // Predicated region
  $region18: #{nominator_forward.1} parent=0 // pred_check
    _
  $region19: #{nominator_forward.1} parent=0 // pred_check_branch
    %1411 = sbr.rel (0) target = $region21
  $region20: #{nominator_forward.1} parent=0 // pred_region
    _
  $region21: #{nominator_forward.1} parent=0 // pred_fallthru
    _
  // Predicated region
  $region22: #{nominator_forward.1} parent=0 // pred_check
    _
  $region23: #{nominator_forward.1} parent=0 // pred_check_branch
    %1413 = sbr.rel (0) target = $region25
  $region24: #{nominator_forward.1} parent=0 // pred_region
    _
  $region25: #{nominator_forward.1} parent=0 // pred_fallthru
    _

</llo_original>
